<compile_context>
chip_gen: v7x
topology: tpu7x:2x2x1
jax: 0.10.0
libtpu: 0.0.40
codegen_flags: <defaults>
</compile_context>

<pallas_src>
import functools
import math

import jax
import jax.numpy as jnp
from jax.experimental import pallas as pl
from jax.experimental.pallas import tpu as pltpu


def _round_up(x, m):
    return pl.cdiv(x, m) * m


def _lstm_seq1_kernel(x_ref, w_ref, b_ref, h_ref, *, hidden, pack):
    """Single-step LSTM cell (zero initial state) for one row-tile.

    x_ref : (TN, D)        input rows (f32 or bf16)
    w_ref : (D, 4H)        packed input->gate weights, PyTorch (i,f,g,o) order
    b_ref : (1, 4H)        combined bias b_ih + b_hh (f32)
    h_ref : (TN//pack, pack*H)  lane-dense view of the (TN, H) hidden output
    """
    # One fused, 128-lane-wide MXU matmul for all four gate bands.
    gates = jnp.dot(x_ref[...], w_ref[...],
                    preferred_element_type=jnp.float32) + b_ref[...]

    i_gate = jax.nn.sigmoid(gates[:, 0 * hidden:1 * hidden])
    g_gate = jnp.tanh(gates[:, 2 * hidden:3 * hidden])
    o_gate = jax.nn.sigmoid(gates[:, 3 * hidden:4 * hidden])
    # forget gate band is unused: c0 = 0, so c = i*g exactly.

    h = o_gate * jnp.tanh(i_gate * g_gate)                 # (TN, H) f32

    if pack > 1:
        # Row-major (TN, H) is bit-identical to (TN//pack, pack*H): fold rows
        # into lanes so the store / HBM writeback is a full 128-lane vst.
        h = h.reshape(h.shape[0] // pack, pack * hidden)

    h_ref[...] = h.astype(h_ref.dtype)


def _reference_forward(x, w_ih, b_ih, b_hh):
    """Pure-JAX f32 reference of the PyTorch forward (for correctness check)."""
    batch, num_days, input_dim = x.shape
    hidden = w_ih.shape[0] // 4
    xf = x.reshape(batch * num_days, input_dim)
    gates = xf @ w_ih.T + b_ih + b_hh
    gi, gf, gg, go = jnp.split(gates, 4, axis=-1)
    i = jax.nn.sigmoid(gi)
    g = jnp.tanh(gg)
    o = jax.nn.sigmoid(go)
    c = i * g
    h = o * jnp.tanh(c)
    return h.reshape(batch, num_days, hidden)


def stock_price_lstm_forward(x, w_ih, w_hh, b_ih, b_hh, *, row_tile=1024,
                             io_dtype=jnp.float32, out_dtype=None,
                             lane_dense=True):
    """x: (batch, num_days, input_dim) -> (batch, num_days, hidden_dim)."""
    del w_hh  # h0 == 0: recurrent weights never contribute on a length-1 seq.
    batch, num_days, input_dim = x.shape
    four_h = w_ih.shape[0]
    hidden = four_h // 4
    if out_dtype is None:
        out_dtype = x.dtype

    n_rows = batch * num_days
    x_flat = x.reshape(n_rows, input_dim).astype(io_dtype)

    # Packed weights (D, 4H), PyTorch band order (i | f | g | o); bias in f32
    # (added after the f32-accumulated matmul).
    w_packed = jnp.asarray(w_ih, jnp.float32).T.astype(io_dtype)
    b_packed = (jnp.asarray(b_ih, jnp.float32)
                + jnp.asarray(b_hh, jnp.float32)).reshape(1, four_h)

    def run(pack):
        # Row-tile constraints: x block needs tile % 8 == 0; the packed output
        # block (tile//pack, pack*H) needs tile % (8*pack) == 0.
        quantum = 8 * pack
        tile = min(row_tile, _round_up(n_rows, quantum))   # don't over-pad tiny N
        tile = max(quantum, _round_up(tile, quantum))
        n_pad = _round_up(n_rows, tile)

        xf = x_flat
        if n_pad != n_rows:
            xf = jnp.pad(xf, ((0, n_pad - n_rows), (0, 0)))

        kernel = functools.partial(_lstm_seq1_kernel, hidden=hidden, pack=pack)
        out = pl.pallas_call(
            kernel,
            out_shape=jax.ShapeDtypeStruct((n_pad // pack, pack * hidden),
                                           out_dtype),
            grid_spec=pltpu.PrefetchScalarGridSpec(
                num_scalar_prefetch=0,
                grid=(n_pad // tile,),
                in_specs=[
                    pl.BlockSpec((tile, input_dim), lambda i: (i, 0)),
                    pl.BlockSpec((input_dim, four_h), lambda i: (0, 0)),
                    pl.BlockSpec((1, four_h), lambda i: (0, 0)),
                ],
                out_specs=pl.BlockSpec((tile // pack, pack * hidden),
                                       lambda i: (i, 0)),
            ),
            compiler_params=pltpu.CompilerParams(
                dimension_semantics=("parallel",)),
        )(xf, w_packed, b_packed)

        # Force compile + execute inside the try so a lowering failure of the
        # lane-dense variant is caught here and we can fall back.
        out = jax.block_until_ready(out)

        # Free row-major metadata reshape back to (N, H), drop row padding.
        h = out.reshape(n_pad, hidden)[:n_rows]
        return h.reshape(batch, num_days, hidden)

    packs = []
    if lane_dense and hidden < 128 and 128 % hidden == 0:
        packs.append(128 // hidden)   # e.g. H=32 -> pack 4 rows into 128 lanes
    packs.append(1)                   # plain (N, H) layout fallback

    last_err = None
    for pack in packs:
        try:
            return run(pack)
        except Exception as err:  # Mosaic capability fallback (reshape lowering)
            last_err = err
    raise last_err


if __name__ == "__main__":
    # Small shapes consistent with the module: batch=2, num_days=8,
    # input_dim=16, hidden_dim=32.
    batch, num_days, input_dim, hidden_dim = 2, 8, 16, 32

    key = jax.random.PRNGKey(0)
    kx, k1, k2, k3, k4 = jax.random.split(key, 5)

    # Deterministic parameter init matching nn.LSTM's U(-1/sqrt(H), 1/sqrt(H)).
    bound = 1.0 / math.sqrt(hidden_dim)
    w_ih = jax.random.uniform(k1, (4 * hidden_dim, input_dim),
                              minval=-bound, maxval=bound, dtype=jnp.float32)
    w_hh = jax.random.uniform(k2, (4 * hidden_dim, hidden_dim),
                              minval=-bound, maxval=bound, dtype=jnp.float32)
    b_ih = jax.random.uniform(k3, (4 * hidden_dim,),
                              minval=-bound, maxval=bound, dtype=jnp.float32)
    b_hh = jax.random.uniform(k4, (4 * hidden_dim,),
                              minval=-bound, maxval=bound, dtype=jnp.float32)

    x = jax.random.normal(kx, (batch, num_days, input_dim), dtype=jnp.float32)

    ref = _reference_forward(x, w_ih, b_ih, b_hh)

    # f32 memory path: matches the PyTorch math to tight tolerance.
    out_f32 = stock_price_lstm_forward(x, w_ih, w_hh, b_ih, b_hh)
    out_f32 = jax.block_until_ready(out_f32)
    assert out_f32.shape == (batch, num_days, hidden_dim)
    assert jnp.allclose(out_f32, ref, atol=1e-5, rtol=1e-5)

    # bf16 memory path (halves HBM traffic; MXU still accumulates in f32).
    out_bf16 = stock_price_lstm_forward(x, w_ih, w_hh, b_ih, b_hh,
                                        io_dtype=jnp.bfloat16,
                                        out_dtype=jnp.bfloat16)
    out_bf16 = jax.block_until_ready(out_bf16)
    assert jnp.allclose(out_bf16.astype(jnp.float32), ref, atol=3e-2, rtol=3e-2)

    print("KERNEL_OK")
</pallas_src>

<mosaic_0001>
module attributes {stable_mosaic.version = 11 : i64} {
  func.func @_lstm_seq1_kernel(%arg0: i32, %arg1: memref<32x16xf32, #tpu.memory_space<vmem>>, %arg2: memref<16x128xf32, #tpu.memory_space<vmem>>, %arg3: memref<1x128xf32, #tpu.memory_space<vmem>>, %arg4: memref<8x128xf32, #tpu.memory_space<vmem>>) attributes {dimension_semantics = [#tpu.dimension_semantics<parallel>], iteration_bounds = array<i64: 1>, scalar_prefetch = 0 : i64, scratch_operands = 0 : i64, tpu.core_type = #tpu.core_type<tc>, window_params = [{transform_indices = @transform_0, window_bounds = array<i64: 32, 16>}, {pipeline_mode = #tpu.pipeline_mode<synchronous>, transform_indices = @transform_1, window_bounds = array<i64: 16, 128>}, {pipeline_mode = #tpu.pipeline_mode<synchronous>, transform_indices = @transform_2, window_bounds = array<i64: 1, 128>}, {transform_indices = @transform_3, window_bounds = array<i64: 8, 128>}]} {
    %c0 = arith.constant 0 : index
    %c0_0 = arith.constant 0 : index
    %0 = vector.load %arg1[%c0, %c0_0] : memref<32x16xf32, #tpu.memory_space<vmem>>, vector<32x16xf32>
    %c0_1 = arith.constant 0 : index
    %c0_2 = arith.constant 0 : index
    %1 = vector.load %arg2[%c0_1, %c0_2] : memref<16x128xf32, #tpu.memory_space<vmem>>, vector<16x128xf32>
    %cst = arith.constant dense<0.000000e+00> : vector<32x128xf32>
    %2 = tpu.matmul %0, %1, %cst {dimension_numbers = #tpu.dot_dimension_numbers<[1], [0], [0], [1], [0, 0, 1, 1], [], []>} : vector<32x16xf32>, vector<16x128xf32>, vector<32x128xf32> -> vector<32x128xf32>
    %c0_3 = arith.constant 0 : index
    %c0_4 = arith.constant 0 : index
    %3 = vector.load %arg3[%c0_3, %c0_4] : memref<1x128xf32, #tpu.memory_space<vmem>>, vector<1x128xf32>
    %4 = vector.broadcast %3 : vector<1x128xf32> to vector<32x128xf32>
    %5 = arith.addf %2, %4 : vector<32x128xf32>
    %6 = vector.extract_strided_slice %5 {offsets = [0, 0], sizes = [32, 32], strides = [1, 1]} : vector<32x128xf32> to vector<32x32xf32>
    %7 = arith.negf %6 : vector<32x32xf32>
    %8 = math.exp %7 : vector<32x32xf32>
    %cst_5 = arith.constant 1.000000e+00 : f32
    %9 = vector.broadcast %cst_5 : f32 to vector<32x32xf32>
    %10 = arith.addf %9, %8 : vector<32x32xf32>
    %11 = arith.divf %9, %10 : vector<32x32xf32>
    %12 = vector.extract_strided_slice %5 {offsets = [0, 64], sizes = [32, 32], strides = [1, 1]} : vector<32x128xf32> to vector<32x32xf32>
    %13 = math.tanh %12 : vector<32x32xf32>
    %14 = vector.extract_strided_slice %5 {offsets = [0, 96], sizes = [32, 32], strides = [1, 1]} : vector<32x128xf32> to vector<32x32xf32>
    %15 = arith.negf %14 : vector<32x32xf32>
    %16 = math.exp %15 : vector<32x32xf32>
    %cst_6 = arith.constant 1.000000e+00 : f32
    %17 = vector.broadcast %cst_6 : f32 to vector<32x32xf32>
    %18 = arith.addf %17, %16 : vector<32x32xf32>
    %19 = arith.divf %17, %18 : vector<32x32xf32>
    %20 = arith.mulf %11, %13 : vector<32x32xf32>
    %21 = math.tanh %20 : vector<32x32xf32>
    %22 = arith.mulf %19, %21 : vector<32x32xf32>
    %23 = vector.shape_cast %22 : vector<32x32xf32> to vector<8x128xf32>
    %c0_7 = arith.constant 0 : index
    %c0_8 = arith.constant 0 : index
    %24 = vector.load %arg4[%c0_7, %c0_8] : memref<8x128xf32, #tpu.memory_space<vmem>>, vector<8x128xf32>
    tpu.vector_store %arg4[%c0_7, %c0_8], %23 {strides = array<i32>} : memref<8x128xf32, #tpu.memory_space<vmem>>, vector<8x128xf32>,
    return
  }
  func.func @transform_0(%arg0: i32) -> (i32, i32) {
    %c0_i32 = arith.constant 0 : i32
    %c0_i32_0 = arith.constant 0 : i32
    return %arg0, %c0_i32 : i32, i32
  }
  func.func @transform_1(%arg0: i32) -> (i32, i32) {
    %c0_i32 = arith.constant 0 : i32
    %c0_i32_0 = arith.constant 0 : i32
    %c0_i32_1 = arith.constant 0 : i32
    return %c0_i32, %c0_i32_0 : i32, i32
  }
  func.func @transform_2(%arg0: i32) -> (i32, i32) {
    %c0_i32 = arith.constant 0 : i32
    %c0_i32_0 = arith.constant 0 : i32
    %c0_i32_1 = arith.constant 0 : i32
    return %c0_i32, %c0_i32_0 : i32, i32
  }
  func.func @transform_3(%arg0: i32) -> (i32, i32) {
    %c0_i32 = arith.constant 0 : i32
    %c0_i32_0 = arith.constant 0 : i32
    return %arg0, %c0_i32 : i32, i32
  }
}

module attributes {stable_mosaic.version = 11 : i64} {
  func.func @_lstm_seq1_kernel(%arg0: i32, %arg1: memref<16x16xf32, #tpu.memory_space<vmem>>, %arg2: memref<16x128xf32, #tpu.memory_space<vmem>>, %arg3: memref<1x128xf32, #tpu.memory_space<vmem>>, %arg4: memref<16x32xf32, #tpu.memory_space<vmem>>) attributes {dimension_semantics = [#tpu.dimension_semantics<parallel>], iteration_bounds = array<i64: 1>, scalar_prefetch = 0 : i64, scratch_operands = 0 : i64, tpu.core_type = #tpu.core_type<tc>, window_params = [{transform_indices = @transform_0, window_bounds = array<i64: 16, 16>}, {pipeline_mode = #tpu.pipeline_mode<synchronous>, transform_indices = @transform_1, window_bounds = array<i64: 16, 128>}, {pipeline_mode = #tpu.pipeline_mode<synchronous>, transform_indices = @transform_2, window_bounds = array<i64: 1, 128>}, {transform_indices = @transform_3, window_bounds = array<i64: 16, 32>}]} {
    %c0 = arith.constant 0 : index
    %c0_0 = arith.constant 0 : index
    %0 = vector.load %arg1[%c0, %c0_0] : memref<16x16xf32, #tpu.memory_space<vmem>>, vector<16x16xf32>
    %c0_1 = arith.constant 0 : index
    %c0_2 = arith.constant 0 : index
    %1 = vector.load %arg2[%c0_1, %c0_2] : memref<16x128xf32, #tpu.memory_space<vmem>>, vector<16x128xf32>
    %cst = arith.constant dense<0.000000e+00> : vector<16x128xf32>
    %2 = tpu.matmul %0, %1, %cst {dimension_numbers = #tpu.dot_dimension_numbers<[1], [0], [0], [1], [0, 0, 1, 1], [], []>} : vector<16x16xf32>, vector<16x128xf32>, vector<16x128xf32> -> vector<16x128xf32>
    %c0_3 = arith.constant 0 : index
    %c0_4 = arith.constant 0 : index
    %3 = vector.load %arg3[%c0_3, %c0_4] : memref<1x128xf32, #tpu.memory_space<vmem>>, vector<1x128xf32>
    %4 = vector.broadcast %3 : vector<1x128xf32> to vector<16x128xf32>
    %5 = arith.addf %2, %4 : vector<16x128xf32>
    %6 = vector.extract_strided_slice %5 {offsets = [0, 0], sizes = [16, 32], strides = [1, 1]} : vector<16x128xf32> to vector<16x32xf32>
    %7 = arith.negf %6 : vector<16x32xf32>
    %8 = math.exp %7 : vector<16x32xf32>
    %cst_5 = arith.constant 1.000000e+00 : f32
    %9 = vector.broadcast %cst_5 : f32 to vector<16x32xf32>
    %10 = arith.addf %9, %8 : vector<16x32xf32>
    %11 = arith.divf %9, %10 : vector<16x32xf32>
    %12 = vector.extract_strided_slice %5 {offsets = [0, 64], sizes = [16, 32], strides = [1, 1]} : vector<16x128xf32> to vector<16x32xf32>
    %13 = math.tanh %12 : vector<16x32xf32>
    %14 = vector.extract_strided_slice %5 {offsets = [0, 96], sizes = [16, 32], strides = [1, 1]} : vector<16x128xf32> to vector<16x32xf32>
    %15 = arith.negf %14 : vector<16x32xf32>
    %16 = math.exp %15 : vector<16x32xf32>
    %cst_6 = arith.constant 1.000000e+00 : f32
    %17 = vector.broadcast %cst_6 : f32 to vector<16x32xf32>
    %18 = arith.addf %17, %16 : vector<16x32xf32>
    %19 = arith.divf %17, %18 : vector<16x32xf32>
    %20 = arith.mulf %11, %13 : vector<16x32xf32>
    %21 = math.tanh %20 : vector<16x32xf32>
    %22 = arith.mulf %19, %21 : vector<16x32xf32>
    %c0_7 = arith.constant 0 : index
    %c0_8 = arith.constant 0 : index
    %23 = vector.load %arg4[%c0_7, %c0_8] : memref<16x32xf32, #tpu.memory_space<vmem>>, vector<16x32xf32>
    tpu.vector_store %arg4[%c0_7, %c0_8], %22 {strides = array<i32>} : memref<16x32xf32, #tpu.memory_space<vmem>>, vector<16x32xf32>,
    return
  }
  func.func @transform_0(%arg0: i32) -> (i32, i32) {
    %c0_i32 = arith.constant 0 : i32
    %c0_i32_0 = arith.constant 0 : i32
    return %arg0, %c0_i32 : i32, i32
  }
  func.func @transform_1(%arg0: i32) -> (i32, i32) {
    %c0_i32 = arith.constant 0 : i32
    %c0_i32_0 = arith.constant 0 : i32
    %c0_i32_1 = arith.constant 0 : i32
    return %c0_i32, %c0_i32_0 : i32, i32
  }
  func.func @transform_2(%arg0: i32) -> (i32, i32) {
    %c0_i32 = arith.constant 0 : i32
    %c0_i32_0 = arith.constant 0 : i32
    %c0_i32_1 = arith.constant 0 : i32
    return %c0_i32, %c0_i32_0 : i32, i32
  }
  func.func @transform_3(%arg0: i32) -> (i32, i32) {
    %c0_i32 = arith.constant 0 : i32
    %c0_i32_0 = arith.constant 0 : i32
    return %arg0, %c0_i32 : i32, i32
  }
}

</mosaic_0001>

<llo_original>
// kernel: tpu_custom_call.1
$region0: #{tpu_custom_call.1}
  #allocation0 [shape = 'u32[]', space=smem, size = 0x4, offset = 0x4, fixed_abs, tag = 'smem constant byte address 0x4 - core index']
  #allocation1 [shape = 'u32[144,128]{1,0:T(1,128)}', space=vmem, size = 0x12000, scoped, tag = 'internal scratch']
  %s0 = inlined_call_operand.hbm [shape: f32[16,16], index: 0, kind: input, shape index: {}]
  %s1 = inlined_call_operand.hbm [shape: f32[16,128], index: 1, kind: input, shape index: {}]
  %s2 = inlined_call_operand.vmem [shape: f32[1,128], index: 2, kind: input, shape index: {}]
  %s3 = inlined_call_operand.hbm [shape: f32[16,32], index: 3, kind: output, shape index: {}]
  %s4 = sld [smem:[#allocation0]]
  $region30: #{tpu_custom_call.1} parent=0
    _
  %s6 = ssub.s32 1, %s4
  %s7 = scalar_select 0, %s6, %s4
  $region1: #{tpu_custom_call.1} parent=0
    #allocation2 [shape = 'u8[8192]{0}', space=vmem, size = 0x2000, scoped, tag = 'input window, operand 0, single buffered']
    #allocation3 [shape = 's32[1]{0}', space=sflag, size = 0x4, scoped, tag = 'scoped memory for tpu_custom_call.1']
    #allocation4 [shape = 's32[1]{0}', space=sflag, size = 0x4, scoped, tag = 'scoped memory for tpu_custom_call.1']
    #allocation5 [shape = 'u8[8192]{0}', space=vmem, size = 0x2000, scoped, tag = 'input window, operand 1, single buffered']
    #allocation6 [shape = 's32[1]{0}', space=sflag, size = 0x4, scoped, tag = 'scoped memory for tpu_custom_call.1']
    #allocation7 [shape = 'u8[8192]{0}', space=vmem, size = 0x2000, scoped, tag = 'output window, operand 0, single buffered']
    %8 = vsyncpa [#allocation3], 0
    %9 = vsyncpa [#allocation6], 0
    %10 = vsyncpa [#allocation4], 0
    // Predicated region
    $region2: #{tpu_custom_call.1} parent=1 // pred_check
      _
    $region3: #{tpu_custom_call.1} parent=1 // pred_check_branch
      %12 = sbr.rel (0) target = $region5
    $region4: #{tpu_custom_call.1} parent=1 // pred_region
      %s14 = ssub.s32 256, 256
      %15 = vsyncadd [#allocation3], %s14
      %s16 = sshll.u32 [#allocation2], 4
      %s17 = int_to_ptr.vmem [resolvable:$true] %s16
      %22 = dma.hbm_to_vmem [thread:$0]  %s0, 256, %s17, [#allocation3], 128, 128, 8
    $region5: #{tpu_custom_call.1} parent=1 // pred_fallthru
      _
    // Predicated region
    $region6: #{tpu_custom_call.1} parent=1 // pred_check
      _
    $region7: #{tpu_custom_call.1} parent=1 // pred_check_branch
      %24 = sbr.rel (0) target = $region9
    $region8: #{tpu_custom_call.1} parent=1 // pred_region
      %s26 = ssub.s32 256, 256
      %27 = vsyncadd [#allocation6], %s26
      %s28 = sshll.u32 [#allocation5], 4
      %s29 = int_to_ptr.vmem [resolvable:$true] %s28
      %34 = dma.hbm_to_vmem [thread:$0]  %s1, 256, %s29, [#allocation6], 128, 128, 8
    $region9: #{tpu_custom_call.1} parent=1 // pred_fallthru
      _
    // Predicated region
    $region10: #{tpu_custom_call.1} parent=1 // pred_check
      _
    $region11: #{tpu_custom_call.1} parent=1 // pred_check_branch
      %36 = sbr.rel (0) target = $region13
    $region12: #{tpu_custom_call.1} parent=1 // pred_region
      _
    $region13: #{tpu_custom_call.1} parent=1 // pred_fallthru
      _
    // Predicated region
    $region14: #{tpu_custom_call.1} parent=1 // pred_check
      _
    $region15: #{tpu_custom_call.1} parent=1 // pred_check_branch
      %38 = sbr.rel (0) target = $region17
    $region16: #{tpu_custom_call.1} parent=1 // pred_region
      %39 = dma.done [#allocation3], 256
    $region17: #{tpu_custom_call.1} parent=1 // pred_fallthru
      _
    // Predicated region
    $region18: #{tpu_custom_call.1} parent=1 // pred_check
      _
    $region19: #{tpu_custom_call.1} parent=1 // pred_check_branch
      %41 = sbr.rel (0) target = $region21
    $region20: #{tpu_custom_call.1} parent=1 // pred_region
      %42 = dma.done [#allocation6], 256
    $region21: #{tpu_custom_call.1} parent=1 // pred_fallthru
      _
    %v43 = vld [vmem:[#allocation2] sm:$0xff]
    %v44 = vld [vmem:[#allocation2 + $0x8] sm:$0xff]
    %v45 = vld [vmem:[#allocation5] sm:$0xff]
    %v46 = vld [vmem:[#allocation5 + $0x8] sm:$0xff]
    %v47 = vld [vmem:[%s2] sm:$0x1]
    %v49 = vlaneseq
    %v50 = vshrl.u32 %v49, 7
    %v51 = vsub.s32 0, %v50
    %v52 = vrot.slane %v47, %v51
    %vm54 = vcmask 130048
    %v56 = vsel %vm54, %v43, 0
    %v59 = vsel %vm54, %v44, 0
    %61 = vmatprep.subr.mxu0 0.0
    %62 = vmatpush1.msra.mxu0 %v45
    %63 = vmatprep.subr.mxu0 0.0
    %64 = vmatpush1.msra.mxu0 %v46
    %65 = vmatprep.subr.mxu0 0.0
    %66 = vmatpush1.msra.mxu0 0.0
    %67 = vmatprep.subr.mxu0 0.0
    %68 = vmatpush1.msra.mxu0 0.0
    %69 = vmatprep.subr.mxu0 0.0
    %70 = vmatpush1.msra.mxu0 0.0
    %71 = vmatprep.subr.mxu0 0.0
    %72 = vmatpush1.msra.mxu0 0.0
    %73 = vmatprep.subr.mxu0 0.0
    %74 = vmatpush1.msra.mxu0 0.0
    %75 = vmatprep.subr.mxu0 0.0
    %76 = vmatpush1.msra.mxu0 0.0
    %77 = vmatprep.subr.mxu0 0.0
    %78 = vmatpush1.msra.mxu0 0.0
    %79 = vmatprep.subr.mxu0 0.0
    %80 = vmatpush1.msra.mxu0 0.0
    %81 = vmatprep.subr.mxu0 0.0
    %82 = vmatpush1.msra.mxu0 0.0
    %83 = vmatprep.subr.mxu0 0.0
    %84 = vmatpush1.msra.mxu0 0.0
    %85 = vmatprep.subr.mxu0 0.0
    %86 = vmatpush1.msra.mxu0 0.0
    %87 = vmatprep.subr.mxu0 0.0
    %88 = vmatpush1.msra.mxu0 0.0
    %89 = vmatprep.subr.mxu0 0.0
    %90 = vmatpush1.msra.mxu0 0.0
    %91 = vmatprep.subr.mxu0 0.0
    %92 = vmatpush1.msra.mxu0 0.0
    %93 = vmatprep.subr.mxu0 0.0
    %94 = vmatpush1.msra.mxu0 0.0
    %95 = vmatprep.subr.mxu0 0.0
    %96 = vmatpush1.msra.mxu0 0.0
    %97 = vmatprep.subr.mxu0 0.0
    %98 = vmatpush1.msra.mxu0 0.0
    %99 = vmatprep.subr.mxu0 0.0
    %100 = vmatpush1.msra.mxu0 0.0
    %101 = vmatprep.subr.mxu0 0.0
    %102 = vmatpush1.msra.mxu0 0.0
    %103 = vmatprep.subr.mxu0 0.0
    %104 = vmatpush1.msra.mxu0 0.0
    %105 = vmatprep.subr.mxu0 0.0
    %106 = vmatpush1.msra.mxu0 0.0
    %107 = vmatprep.subr.mxu0 0.0
    %108 = vmatpush1.msra.mxu0 0.0
    %109 = vmatprep.subr.mxu0 0.0
    %110 = vmatpush1.msra.mxu0 0.0
    %111 = vmatprep.subr.mxu0 0.0
    %112 = vmatpush1.msra.mxu0 0.0
    %113 = vmatprep.subr.mxu0 0.0
    %114 = vmatpush1.msra.mxu0 0.0
    %115 = vmatprep.subr.mxu0 0.0
    %116 = vmatpush1.msra.mxu0 0.0
    %117 = vmatprep.subr.mxu0 0.0
    %118 = vmatpush1.msra.mxu0 0.0
    %119 = vmatprep.subr.mxu0 0.0
    %120 = vmatpush1.msra.mxu0 0.0
    %121 = vmatprep.subr.mxu0 0.0
    %122 = vmatpush1.msra.mxu0 0.0
    %123 = vmatprep.subr.mxu0 0.0
    %124 = vmatpush1.msra.mxu0 0.0
    %125 = vmatprep.mubr.f32.mxu0 0.0
    %126 = vmatmul.mubr.f32.gmra.mrb[0].mxu0 %v56
    %v127 = vpop.f32.mrb[0].mxu0
    %v128 = vadd.f32 %v52, %v127
    %v129 = vpop.f32.mrb[0].mxu0
    %130 = vmatprep.mubr.f32.mxu0 0.0
    %131 = vmatmul.mubr.f32.gmra.mrb[0].mxu0 %v59
    %v132 = vpop.f32.mrb[0].mxu0
    %v133 = vadd.f32 %v52, %v132
    %v134 = vpop.f32.mrb[0].mxu0
    %135 = vdwg.mxu0
    %v136 = vxor.u32 %v128, 2147483648
    %v137 = vxor.u32 %v133, 2147483648
    %v138 = vmul.f32 %v136, 1.442695
    %v139 = vpow.pop %v138
    %v140 = vmul.f32 %v137, 1.442695
    %v141 = vpow.pop %v140
    %v142 = vadd.f32 %v139, 1.0
    %v143 = vadd.f32 %v141, 1.0
    %v144 = vrcp.pop %v142
    %v145 = vmul.f32 1.0, %v144
    %v146 = vrcp.pop %v143
    %v147 = vmul.f32 1.0, %v146
    %v148 = vtanh.pop %v128
    %v149 = vtanh.pop %v133
    %152 = vrot.lane.b32.xlu0 %v148, 64
    %v153 = vpop.permute.xlu0 %152
    %154 = vrot.lane.b32.xlu0 %v149, 64
    %v155 = vpop.permute.xlu0 %154
    %v158 = vmul.f32 %v145, %v153
    %v159 = vmul.f32 %v147, %v155
    %v160 = vtanh.pop %v158
    %v161 = vtanh.pop %v159
    %164 = vrot.lane.b32.xlu0 %v160, 96
    %v165 = vpop.permute.xlu0 %164
    %166 = vrot.lane.b32.xlu0 %v161, 96
    %v167 = vpop.permute.xlu0 %166
    %v170 = vmul.f32 %v145, %v165
    %v171 = vmul.f32 %v147, %v167
    %174 = vrot.lane.b32.xlu0 %v170, 32
    %v175 = vpop.permute.xlu0 %174
    %176 = vrot.lane.b32.xlu0 %v171, 32
    %v177 = vpop.permute.xlu0 %176
    %vm180 = vcmask 261120
    %181 = vst.msk [vmem:[#allocation7] sm:$0xff] %vm180, %v175
    %182 = vst.msk [vmem:[#allocation7 + $0x8] sm:$0xff] %vm180, %v177
    // Predicated region
    $region22: #{tpu_custom_call.1} parent=1 // pred_check
      _
    $region23: #{tpu_custom_call.1} parent=1 // pred_check_branch
      %184 = sbr.rel (0) target = $region25
    $region24: #{tpu_custom_call.1} parent=1 // pred_region
      %s186 = ssub.s32 256, 256
      %187 = vsyncadd [#allocation4], %s186
      %s188 = sshll.u32 [#allocation7], 4
      %s189 = int_to_ptr.vmem [resolvable:$true] %s188
      %194 = dma.vmem_to_hbm [thread:$0]  %s189, 256, %s3, [#allocation4], 128, 128, 8
    $region25: #{tpu_custom_call.1} parent=1 // pred_fallthru
      _
    // Predicated region
    $region26: #{tpu_custom_call.1} parent=1 // pred_check
      _
    $region27: #{tpu_custom_call.1} parent=1 // pred_check_branch
      %196 = sbr.rel (0) target = $region29
    $region28: #{tpu_custom_call.1} parent=1 // pred_region
      %197 = dma.done [#allocation4], 256
    $region29: #{tpu_custom_call.1} parent=1 // pred_fallthru
      _
    %198 = vsyncpa [#allocation3], 1
    %199 = vsyncpa [#allocation6], 1
    %200 = vsyncpa [#allocation4], 1

</llo_original>
